<compile_context>
chip_gen: v7x
topology: tpu7x:2x2x1
jax: 0.10.0
libtpu: 0.0.40
codegen_flags: <defaults>
</compile_context>

<pallas_src>
import functools

import jax
import jax.numpy as jnp
from jax.experimental import pallas as pl
from jax.experimental.pallas import tpu as pltpu


def _simam_kernel(x_ref, o_ref, *, hw: int, e_lambda: float):
    """One block of rows; each row is one (b, c) channel flattened over H*W.

    Computes (per row, over the true hw spatial elements):
      mu  = mean(x)
      d   = (x - mu)^2
      y   = d / (4 * (sum(d) / (hw - 1) + e_lambda)) + 0.5
      out = x * sigmoid(y)
    """
    x_in = x_ref[...]                                       # (BM, HW_pad)

    # ---- per-row statistics: single fused traversal, f32 accumulation ----
    xf = x_in.astype(jnp.float32)
    sum_x = jnp.sum(xf, axis=-1, keepdims=True)             # (BM, 1)
    sum_x2 = jnp.sum(xf * xf, axis=-1, keepdims=True)       # (BM, 1)

    inv_hw = jnp.float32(1.0 / hw)
    mu = sum_x * inv_hw                                     # (BM, 1)
    # sum((x - mu)^2) == sum(x^2) - sum(x)^2 / hw ; zero-padded lanes add 0 to
    # both sums, so the statistics are exact under lane padding.
    s = sum_x2 - sum_x * sum_x * inv_hw                     # (BM, 1)
    # hw == 1 gives a runtime divide-by-zero, matching the PyTorch module.
    denom = 4.0 * (s / (hw - 1.0) + jnp.float32(e_lambda))  # (BM, 1)

    # EUP approximate reciprocal + one Newton refinement (per row only) keeps
    # ~f32 accuracy while routing the hard part off the VPU.
    inv = pl.reciprocal(denom, approx=True)
    inv = inv * (2.0 - denom * inv)                         # (BM, 1)

    # ---- single elementwise pass ----
    # bf16 I/O keeps the elementwise math in bf16 (halves VPU/EUP work on
    # v6e/v7x); everything else runs in f32. Stats above are always f32.
    cdtype = jnp.bfloat16 if x_in.dtype == jnp.bfloat16 else jnp.float32
    xc = x_in.astype(cdtype)
    d = (xc - mu.astype(cdtype)) ** 2                       # (BM, HW_pad)
    y = d * inv.astype(cdtype) + 0.5                        # (BM, HW_pad)
    out = xc * jax.nn.sigmoid(y)
    o_ref[...] = out.astype(o_ref.dtype)


def simam_pallas(x: jax.Array, e_lambda: float = 1e-4) -> jax.Array:
    """SimAM forward. x: (B, C, H, W) -> (B, C, H, W)."""
    b, c, h, w = x.shape
    hw = h * w
    rows = b * c

    x2d = x.reshape(rows, hw)

    # Lane-dense layout: zero-pad the spatial axis up to a multiple of 128.
    # Exact w.r.t. the one-pass statistics; padded output lanes are sliced off.
    hw_pad = ((hw + 127) // 128) * 128
    if hw_pad != hw:
        x2d = jnp.pad(x2d, ((0, 0), (0, hw_pad - hw)))

    # Row tiling: largest multiple-of-8 block that keeps ~2 MiB per block side
    # (the pipeline double-buffers input and output -> ~4x that resident),
    # capped by the (rounded-up) row count.
    row_bytes = hw_pad * x.dtype.itemsize
    target_block_bytes = 2 * 1024 * 1024
    block_rows = (target_block_bytes // row_bytes) // 8 * 8
    rows_rounded = ((rows + 7) // 8) * 8
    block_rows = max(8, min(block_rows, rows_rounded, 2048))
    # TODO(synk): for very large spatial maps (H*W rows of >~256 KiB) add a second
    # 'arbitrary' grid axis over HW with per-row accumulator scratch so the block
    # still fits v7x's 64 MiB VMEM.

    # Partial last block is fine: rows are fully independent (per-row reductions
    # only), overhang rows compute on unspecified data and their writes are
    # dropped -> no jnp.pad / slice HBM copies on the row axis.
    grid = (pl.cdiv(rows, block_rows),)

    kernel = functools.partial(_simam_kernel, hw=hw, e_lambda=e_lambda)

    out2d = pl.pallas_call(
        kernel,
        out_shape=jax.ShapeDtypeStruct((rows, hw_pad), x.dtype),
        grid_spec=pltpu.PrefetchScalarGridSpec(
            num_scalar_prefetch=0,
            grid=grid,
            in_specs=[pl.BlockSpec((block_rows, hw_pad), lambda i: (i, 0))],
            out_specs=pl.BlockSpec((block_rows, hw_pad), lambda i: (i, 0)),
        ),
        compiler_params=pltpu.CompilerParams(
            dimension_semantics=("parallel",),
            vmem_limit_bytes=48 * 1024 * 1024,
        ),
    )(x2d)

    if hw_pad != hw:
        out2d = out2d[:, :hw]
    return out2d.reshape(b, c, h, w)


def simam_reference(x: jax.Array, e_lambda: float = 1e-4) -> jax.Array:
    """Pure-JAX reference matching the PyTorch module exactly (two-pass)."""
    b, c, h, w = x.shape
    n = w * h - 1
    mu = jnp.mean(x, axis=(2, 3), keepdims=True)
    d = (x - mu) ** 2
    y = d / (4.0 * (jnp.sum(d, axis=(2, 3), keepdims=True) / n + e_lambda)) + 0.5
    return x * jax.nn.sigmoid(y)


if __name__ == "__main__":
    key = jax.random.PRNGKey(0)
    B, C, H, W = 2, 4, 16, 16
    x = jax.random.normal(key, (B, C, H, W), dtype=jnp.float32)

    out = simam_pallas(x)
    out = jax.block_until_ready(out)

    ref = simam_reference(x)
    assert out.shape == (B, C, H, W)
    # Tolerance slightly looser than before: the fused one-pass variance
    # (sum(x^2) - sum(x)^2/hw) differs from the two-pass reference at ~1e-6 rel.
    assert jnp.allclose(out, ref, atol=1e-4, rtol=1e-4), (
        f"max abs err = {jnp.max(jnp.abs(out - ref))}"
    )
    print("KERNEL_OK")
</pallas_src>

<mosaic_0001>
module attributes {stable_mosaic.version = 11 : i64} {
  func.func @_simam_kernel(%arg0: i32, %arg1: memref<8x256xf32, #tpu.memory_space<vmem>>, %arg2: memref<8x256xf32, #tpu.memory_space<vmem>>) attributes {dimension_semantics = [#tpu.dimension_semantics<parallel>], iteration_bounds = array<i64: 1>, scalar_prefetch = 0 : i64, scratch_operands = 0 : i64, tpu.core_type = #tpu.core_type<tc>, window_params = [{transform_indices = @transform_0, window_bounds = array<i64: 8, 256>}, {transform_indices = @transform_1, window_bounds = array<i64: 8, 256>}]} {
    %c0 = arith.constant 0 : index
    %c0_0 = arith.constant 0 : index
    %0 = vector.load %arg1[%c0, %c0_0] : memref<8x256xf32, #tpu.memory_space<vmem>>, vector<8x256xf32>
    %cst = arith.constant dense<0.000000e+00> : vector<8xf32>
    %1 = vector.multi_reduction <add>, %0, %cst [1] : vector<8x256xf32> to vector<8xf32>
    %2 = vector.shape_cast %1 : vector<8xf32> to vector<8x1xf32>
    %3 = arith.mulf %0, %0 : vector<8x256xf32>
    %cst_1 = arith.constant dense<0.000000e+00> : vector<8xf32>
    %4 = vector.multi_reduction <add>, %3, %cst_1 [1] : vector<8x256xf32> to vector<8xf32>
    %5 = vector.shape_cast %4 : vector<8xf32> to vector<8x1xf32>
    %cst_2 = arith.constant 3.906250e-03 : f32
    %6 = vector.broadcast %cst_2 : f32 to vector<8x1xf32>
    %7 = arith.mulf %2, %6 : vector<8x1xf32>
    %8 = arith.mulf %2, %2 : vector<8x1xf32>
    %cst_3 = arith.constant 3.906250e-03 : f32
    %9 = vector.broadcast %cst_3 : f32 to vector<8x1xf32>
    %10 = arith.mulf %8, %9 : vector<8x1xf32>
    %11 = arith.subf %5, %10 : vector<8x1xf32>
    %cst_4 = arith.constant 2.550000e+02 : f32
    %12 = vector.broadcast %cst_4 : f32 to vector<8x1xf32>
    %13 = arith.divf %11, %12 : vector<8x1xf32>
    %cst_5 = arith.constant 9.99999974E-5 : f32
    %14 = vector.broadcast %cst_5 : f32 to vector<8x1xf32>
    %15 = arith.addf %13, %14 : vector<8x1xf32>
    %cst_6 = arith.constant 4.000000e+00 : f32
    %16 = vector.broadcast %cst_6 : f32 to vector<8x1xf32>
    %17 = arith.mulf %16, %15 : vector<8x1xf32>
    %18 = tpu.reciprocal %17 {approx = true} : vector<8x1xf32> -> vector<8x1xf32>
    %19 = arith.mulf %17, %18 : vector<8x1xf32>
    %cst_7 = arith.constant 2.000000e+00 : f32
    %20 = vector.broadcast %cst_7 : f32 to vector<8x1xf32>
    %21 = arith.subf %20, %19 : vector<8x1xf32>
    %22 = arith.mulf %18, %21 : vector<8x1xf32>
    %23 = vector.broadcast %7 : vector<8x1xf32> to vector<8x256xf32>
    %24 = arith.subf %0, %23 : vector<8x256xf32>
    %25 = arith.mulf %24, %24 : vector<8x256xf32>
    %26 = vector.broadcast %22 : vector<8x1xf32> to vector<8x256xf32>
    %27 = arith.mulf %25, %26 : vector<8x256xf32>
    %cst_8 = arith.constant 5.000000e-01 : f32
    %28 = vector.broadcast %cst_8 : f32 to vector<8x256xf32>
    %29 = arith.addf %27, %28 : vector<8x256xf32>
    %30 = arith.negf %29 : vector<8x256xf32>
    %31 = math.exp %30 : vector<8x256xf32>
    %cst_9 = arith.constant 1.000000e+00 : f32
    %32 = vector.broadcast %cst_9 : f32 to vector<8x256xf32>
    %33 = arith.addf %32, %31 : vector<8x256xf32>
    %34 = arith.divf %32, %33 : vector<8x256xf32>
    %35 = arith.mulf %0, %34 : vector<8x256xf32>
    %c0_10 = arith.constant 0 : index
    %c0_11 = arith.constant 0 : index
    %36 = vector.load %arg2[%c0_10, %c0_11] : memref<8x256xf32, #tpu.memory_space<vmem>>, vector<8x256xf32>
    tpu.vector_store %arg2[%c0_10, %c0_11], %35 {strides = array<i32>} : memref<8x256xf32, #tpu.memory_space<vmem>>, vector<8x256xf32>,
    return
  }
  func.func @transform_0(%arg0: i32) -> (i32, i32) {
    %c0_i32 = arith.constant 0 : i32
    %c0_i32_0 = arith.constant 0 : i32
    return %arg0, %c0_i32 : i32, i32
  }
  func.func @transform_1(%arg0: i32) -> (i32, i32) {
    %c0_i32 = arith.constant 0 : i32
    %c0_i32_0 = arith.constant 0 : i32
    return %arg0, %c0_i32 : i32, i32
  }
}

</mosaic_0001>

<llo_original>
// kernel: tpu_custom_call.1
$region0: #{tpu_custom_call.1}
  #allocation0 [shape = 'u32[]', space=smem, size = 0x4, offset = 0x4, fixed_abs, tag = 'smem constant byte address 0x4 - core index']
  #allocation1 [shape = 'u32[144,128]{1,0:T(1,128)}', space=vmem, size = 0x12000, scoped, tag = 'internal scratch']
  %s0 = inlined_call_operand.hbm [shape: f32[8,256], index: 0, kind: input, shape index: {}]
  %s1 = inlined_call_operand.hbm [shape: f32[8,256], index: 1, kind: output, shape index: {}]
  %s2 = sld [smem:[#allocation0]]
  $region18: #{tpu_custom_call.1} parent=0
    _
  %s4 = ssub.s32 1, %s2
  %s5 = scalar_select 0, %s4, %s2
  $region1: #{tpu_custom_call.1} parent=0
    #allocation2 [shape = 'u8[8192]{0}', space=vmem, size = 0x2000, scoped, tag = 'input window, operand 0, single buffered']
    #allocation3 [shape = 's32[1]{0}', space=sflag, size = 0x4, scoped, tag = 'scoped memory for tpu_custom_call.1']
    #allocation4 [shape = 's32[1]{0}', space=sflag, size = 0x4, scoped, tag = 'scoped memory for tpu_custom_call.1']
    #allocation5 [shape = 'u8[8192]{0}', space=vmem, size = 0x2000, scoped, tag = 'output window, operand 0, single buffered']
    %6 = vsyncpa [#allocation3], 0
    %7 = vsyncpa [#allocation4], 0
    // Predicated region
    $region2: #{tpu_custom_call.1} parent=1 // pred_check
      _
    $region3: #{tpu_custom_call.1} parent=1 // pred_check_branch
      %9 = sbr.rel (0) target = $region5
    $region4: #{tpu_custom_call.1} parent=1 // pred_region
      %s11 = ssub.s32 256, 256
      %12 = vsyncadd [#allocation3], %s11
      %s14 = sshll.u32 [#allocation2], 4
      %s15 = int_to_ptr.vmem [resolvable:$true] %s14
      %17 = dma.hbm_to_vmem [thread:$0]  %s0, 256, %s15, [#allocation3]
    $region5: #{tpu_custom_call.1} parent=1 // pred_fallthru
      _
    // Predicated region
    $region6: #{tpu_custom_call.1} parent=1 // pred_check
      _
    $region7: #{tpu_custom_call.1} parent=1 // pred_check_branch
      %19 = sbr.rel (0) target = $region9
    $region8: #{tpu_custom_call.1} parent=1 // pred_region
      %20 = dma.done [#allocation3], 256
    $region9: #{tpu_custom_call.1} parent=1 // pred_fallthru
      _
    %v21 = vld [vmem:[#allocation2] sm:$0xff]
    %v22 = vld [vmem:[#allocation2 + $0x8] sm:$0xff]
    %v23 = vadd.f32 %v21, %v22
    %24 = vadd.xlane.f32.xlu0 %v23
    %v25 = vpop.xlane.xlu0 %24
    %v26 = vmul.f32 %v21, %v21
    %v27 = vmul.f32 %v22, %v22
    %v28 = vadd.f32 %v26, %v27
    %29 = vadd.xlane.f32.xlu0 %v28
    %v30 = vpop.xlane.xlu0 %29
    %v31 = vmul.f32 %v25, 0.00390625
    %v32 = vmul.f32 %v25, %v25
    %v33 = vmul.f32 %v32, 0.00390625
    %v34 = vsub.f32 %v30, %v33
    %v35 = vrcp.pop 255.0
    %v36 = vmul.f32 %v34, %v35
    %v37 = vadd.f32 %v36, 0.0001
    %v38 = vmul.f32 %v37, 4.0
    %v39 = vrcp.pop %v38
    %v40 = vmul.f32 %v38, %v39
    %v41 = vsub.f32 2.0, %v40
    %v42 = vmul.f32 %v39, %v41
    %v43 = vsub.f32 %v21, %v31
    %v44 = vsub.f32 %v22, %v31
    %v45 = vmul.f32 %v43, %v43
    %v46 = vmul.f32 %v44, %v44
    %v47 = vmul.f32 %v45, %v42
    %v48 = vmul.f32 %v46, %v42
    %v49 = vadd.f32 %v47, 0.5
    %v50 = vadd.f32 %v48, 0.5
    %v51 = vxor.u32 %v49, 2147483648
    %v52 = vxor.u32 %v50, 2147483648
    %v53 = vmul.f32 %v51, 1.442695
    %v54 = vpow.pop %v53
    %v55 = vmul.f32 %v52, 1.442695
    %v56 = vpow.pop %v55
    %v57 = vadd.f32 %v54, 1.0
    %v58 = vadd.f32 %v56, 1.0
    %v59 = vrcp.pop %v57
    %v60 = vmul.f32 1.0, %v59
    %v61 = vrcp.pop %v58
    %v62 = vmul.f32 1.0, %v61
    %v63 = vmul.f32 %v21, %v60
    %v64 = vmul.f32 %v22, %v62
    %65 = vst [vmem:[#allocation5] sm:$0xff] %v63
    %66 = vst [vmem:[#allocation5 + $0x8] sm:$0xff] %v64
    // Predicated region
    $region10: #{tpu_custom_call.1} parent=1 // pred_check
      _
    $region11: #{tpu_custom_call.1} parent=1 // pred_check_branch
      %68 = sbr.rel (0) target = $region13
    $region12: #{tpu_custom_call.1} parent=1 // pred_region
      %s70 = ssub.s32 256, 256
      %71 = vsyncadd [#allocation4], %s70
      %s73 = sshll.u32 [#allocation5], 4
      %s74 = int_to_ptr.vmem [resolvable:$true] %s73
      %76 = dma.vmem_to_hbm [thread:$0]  %s74, 256, %s1, [#allocation4]
    $region13: #{tpu_custom_call.1} parent=1 // pred_fallthru
      _
    // Predicated region
    $region14: #{tpu_custom_call.1} parent=1 // pred_check
      _
    $region15: #{tpu_custom_call.1} parent=1 // pred_check_branch
      %78 = sbr.rel (0) target = $region17
    $region16: #{tpu_custom_call.1} parent=1 // pred_region
      %79 = dma.done [#allocation4], 256
    $region17: #{tpu_custom_call.1} parent=1 // pred_fallthru
      _
    %80 = vsyncpa [#allocation3], 1
    %81 = vsyncpa [#allocation4], 1

</llo_original>
